<compile_context>
chip_gen: v7x
topology: tpu7x:2x2x1
jax: 0.10.0
libtpu: 0.0.40
codegen_flags: <defaults>
</compile_context>

<pallas_src>
import math

import jax
import jax.numpy as jnp
from jax.experimental import pallas as pl
from jax.experimental.pallas import tpu as pltpu


_LANE_TILE_CAP = 65536          # max batch-tile width (lanes)


def _cdiv(a, b):
    return -(-a // b)


def _vmem_capacity_bytes():
    try:
        return int(pltpu.get_tpu_info().vmem_capacity_bytes)
    except Exception:
        return 64 * 1024 * 1024   # conservative (v7x-sized) fallback


# ---------------------------------------------------------------------------
# Kernel 1 (one-shot): attention row for `group`.  Batch-invariant, runs once.
# ---------------------------------------------------------------------------
def attention_row_kernel(group_ref, key_ref, query_ref, attn_ref):
    # group_ref : SMEM (1,) int32   -- scalar-prefetched group index
    # key_ref   : VMEM (1, 1, D)    -- key_w[group], gathered by the BlockSpec
    # query_ref : VMEM (M, D)
    # attn_ref  : VMEM (M, 1)       -- softmax(scores[group] / 3)
    M, D = query_ref.shape
    g = group_ref[0]

    key_row = key_ref[0]            # (1, D) -- already the gathered group row
    query = query_ref[...]          # (M, D)

    # scores[m] = <query[m], key[group]> * 1/(3*sqrt(D))
    # (score scale and softmax temperature folded into one constant).
    scale = 1.0 / (3.0 * math.sqrt(D))
    scores = jnp.sum(query * key_row, axis=-1, keepdims=True) * scale  # (M, 1)

    # masked_fill(eye(M), -inf) restricted to row `group`: mask position g.
    model_ids = jax.lax.broadcasted_iota(jnp.int32, (M, 1), 0)
    logits = jnp.where(model_ids == g, -jnp.inf, scores)

    # single-row softmax over the M models (runs once -> exact reciprocal,
    # keeps the 1e-5 tolerance comfortably)
    m_max = jnp.max(logits, axis=0, keepdims=True)            # (1, 1)
    e = jnp.exp(logits - m_max)                                # (M, 1)
    denom = jnp.sum(e, axis=0, keepdims=True)                  # (1, 1)
    attn_ref[...] = e * pl.reciprocal(denom, approx=False)


# ---------------------------------------------------------------------------
# Kernel 2 (gridded over batch tiles): out[b] = sum_m x[m, b] * attn[m].
# ---------------------------------------------------------------------------
def weighted_sum_kernel(attn_ref, x_ref, out_ref):
    # attn_ref : VMEM (M, 1)   -- constant block index -> stays resident
    # x_ref    : VMEM (M, TB)  -- batch tile
    # out_ref  : VMEM (1, TB)
    # VPU broadcast-multiply + sublane reduce.  MXU deliberately not used:
    # with K = M ~ 4 it would run at <4% utilization (shape-dependent choice).
    out = jnp.sum(x_ref[...] * attn_ref[...], axis=0, keepdims=True)
    out_ref[...] = out.astype(out_ref.dtype)


def _plan_batch_tiles(batch, num_models, itemsize=4):
    """VMEM-budgeted, generation-aware batch tiling.

    Returns (padded_batch, tile_b, num_tiles) with tile_b a multiple of 128,
    num_tiles >= 2 (so v7x's second TensorCore gets work under "parallel"
    dimension semantics) and the double-buffered footprint
    2 * (M + 1) * tile_b * itemsize well inside the per-chip VMEM budget."""
    vmem_cap = _vmem_capacity_bytes()
    budget = (vmem_cap * 3) // 4                      # headroom over the 2-buffer footprint
    per_lane = 2 * (num_models + 1) * itemsize        # 2 buffers x (x rows + out row)
    tile_cap = max(128, min(_LANE_TILE_CAP, (budget // per_lane) // 128 * 128))

    b128 = _cdiv(batch, 128) * 128                    # lane-align
    num_tiles = max(2, _cdiv(b128, tile_cap))         # >= 2 tiles for megacore
    tile_b = _cdiv(_cdiv(b128, num_tiles), 128) * 128
    return tile_b * num_tiles, tile_b, num_tiles


def self_attention_forward(x, group, key_w, query_w):
    """x: (num_models, batch), group: scalar int, weights: (num_models, dim)."""
    M, B = x.shape
    Mk, D = key_w.shape
    assert Mk == M and query_w.shape == (M, D)

    # Clamp keeps an invalid (possibly data-dependent) group from becoming an
    # unchecked out-of-bounds gather at the BlockSpec level.
    group_arr = jnp.clip(jnp.asarray(group, jnp.int32), 0, M - 1).reshape((1,))

    # View key_w as (M, 1, D): a (1, 1, D) block (one gathered row) then has
    # its last two dims equal to the full array dims (TPU tiling rule).
    key_3d = key_w.reshape(M, 1, D)

    # ---- one-shot attention row (batch-invariant, NOT per batch tile) ------
    attn = pl.pallas_call(
        attention_row_kernel,
        out_shape=jax.ShapeDtypeStruct((M, 1), jnp.float32),
        grid_spec=pltpu.PrefetchScalarGridSpec(
            num_scalar_prefetch=1,
            grid=(1,),
            in_specs=[
                # key_w[group] only: the scalar-prefetched group drives the
                # gather, so a single (1, D) row is DMA'd instead of all keys.
                pl.BlockSpec((1, 1, D), lambda i, g: (g[0], 0, 0)),
                pl.BlockSpec((M, D), lambda i, g: (0, 0)),     # query_w
            ],
            out_specs=pl.BlockSpec((M, 1), lambda i, g: (0, 0)),
        ),
        compiler_params=pltpu.CompilerParams(
            dimension_semantics=("arbitrary",)),
    )(group_arr, key_3d, query_w)

    # ---- batch contraction over large, lane-dense, parallel tiles ----------
    vmem_cap = _vmem_capacity_bytes()
    b_pad, tb, n_tiles = _plan_batch_tiles(B, M, itemsize=x.dtype.itemsize)
    x_in = x if b_pad == B else jnp.pad(x, ((0, 0), (0, b_pad - B)))

    out = pl.pallas_call(
        weighted_sum_kernel,
        out_shape=jax.ShapeDtypeStruct((1, b_pad), jnp.float32),
        grid=(n_tiles,),
        in_specs=[
            pl.BlockSpec((M, 1), lambda i: (0, 0)),    # attn row (resident)
            # TODO(synk): sweep pipeline_mode=pl.Buffered(3) on the x spec and
            # keep it only if a trace shows exposed DMA.
            pl.BlockSpec((M, tb), lambda i: (0, i)),   # x batch tile
        ],
        out_specs=pl.BlockSpec((1, tb), lambda i: (0, i)),
        compiler_params=pltpu.CompilerParams(
            # independent batch tiles -> megacore-shardable on v7x (>=2 tiles
            # guaranteed by _plan_batch_tiles); measured-neutral on v5e/v6e.
            dimension_semantics=("parallel",),
            # explicit, generation-aware scoped-VMEM ceiling with headroom
            vmem_limit_bytes=int(min(vmem_cap * 0.85, 100 * 1024 * 1024)),
        ),
    )(attn, x_in)
    return out.reshape((b_pad,))[:B]


def _reference_forward(x, group, key_w, query_w):
    """Pure-JAX reference of the PyTorch forward (exact f32) for a tight check."""
    M, D = key_w.shape
    scores = jnp.sum(key_w[:, None, :] * query_w[None, :, :], axis=-1)
    scores = scores / math.sqrt(D)
    scores = jnp.where(jnp.eye(M, dtype=bool), -jnp.inf, scores)
    attn = jax.nn.softmax(scores / 3.0, axis=-1)
    return jnp.sum(x.T * attn[group], axis=-1)


if __name__ == "__main__":
    num_models = 4
    dim = 32
    batch = 8

    key = jax.random.PRNGKey(0)
    k1, k2, k3 = jax.random.split(key, 3)

    # xavier_normal_: std = gain * sqrt(2 / (fan_in + fan_out)), gain = 1
    xavier_std = math.sqrt(2.0 / (num_models + dim))
    query_w = xavier_std * jax.random.normal(k1, (num_models, dim), jnp.float32)
    key_w = xavier_std * jax.random.normal(k2, (num_models, dim), jnp.float32)

    # x: (num_models, batch), exactly as passed to the PyTorch forward
    x = jax.random.normal(k3, (num_models, batch), jnp.float32)
    group = 1  # scalar group index

    out = self_attention_forward(x, group, key_w, query_w)
    out = jax.block_until_ready(out)

    ref = _reference_forward(x, group, key_w, query_w)
    assert out.shape == (batch,)
    assert jnp.allclose(out, ref, atol=1e-5, rtol=1e-5), (out, ref)

    print("KERNEL_OK")
</pallas_src>

<mosaic_0001>
module attributes {stable_mosaic.version = 11 : i64} {
  func.func @attention_row_kernel(%arg0: i32, %arg1: memref<1xi32, #tpu.memory_space<smem>>, %arg2: memref<1x1x32xf32, #tpu.memory_space<vmem>>, %arg3: memref<4x32xf32, #tpu.memory_space<vmem>>, %arg4: memref<4x1xf32, #tpu.memory_space<vmem>>) attributes {dimension_semantics = [#tpu.dimension_semantics<arbitrary>], iteration_bounds = array<i64: 1>, scalar_prefetch = 1 : i64, scratch_operands = 0 : i64, tpu.core_type = #tpu.core_type<tc>, window_params = [{transform_indices = @transform_0, window_bounds = array<i64: 1, 1, 32>}, {pipeline_mode = #tpu.pipeline_mode<synchronous>, transform_indices = @transform_1, window_bounds = array<i64: 4, 32>}, {pipeline_mode = #tpu.pipeline_mode<synchronous>, transform_indices = @transform_2, window_bounds = array<i64: 4, 1>}]} {
    %c0 = arith.constant 0 : index
    %0 = memref.load %arg1[%c0] : memref<1xi32, #tpu.memory_space<smem>>
    %c0_0 = arith.constant 0 : index
    %c0_1 = arith.constant 0 : index
    %c0_2 = arith.constant 0 : index
    %1 = vector.load %arg2[%c0_0, %c0_1, %c0_2] : memref<1x1x32xf32, #tpu.memory_space<vmem>>, vector<1x1x32xf32>
    %2 = vector.shape_cast %1 : vector<1x1x32xf32> to vector<1x32xf32>
    %c0_3 = arith.constant 0 : index
    %c0_4 = arith.constant 0 : index
    %3 = vector.load %arg3[%c0_3, %c0_4] : memref<4x32xf32, #tpu.memory_space<vmem>>, vector<4x32xf32>
    %4 = vector.broadcast %2 : vector<1x32xf32> to vector<4x32xf32>
    %5 = arith.mulf %3, %4 : vector<4x32xf32>
    %cst = arith.constant dense<0.000000e+00> : vector<4xf32>
    %6 = vector.multi_reduction <add>, %5, %cst [1] : vector<4x32xf32> to vector<4xf32>
    %7 = vector.shape_cast %6 : vector<4xf32> to vector<4x1xf32>
    %cst_5 = arith.constant 0.0589255653 : f32
    %8 = vector.broadcast %cst_5 : f32 to vector<4x1xf32>
    %9 = arith.mulf %7, %8 : vector<4x1xf32>
    %10 = tpu.iota {dimensions = array<i32: 0>} : vector<4x1xi32>
    %11 = vector.broadcast %0 : i32 to vector<4x1xi32>
    %12 = arith.cmpi eq, %10, %11 : vector<4x1xi32>
    %cst_6 = arith.constant 0xFF800000 : f32
    %13 = vector.broadcast %cst_6 : f32 to vector<4x1xf32>
    %14 = arith.select %12, %13, %9 : vector<4x1xi1>, vector<4x1xf32>
    %cst_7 = arith.constant dense<0xFF800000> : vector<1xf32>
    %15 = vector.multi_reduction <maximumf>, %14, %cst_7 [0] : vector<4x1xf32> to vector<1xf32>
    %16 = vector.shape_cast %15 : vector<1xf32> to vector<1x1xf32>
    %17 = vector.broadcast %16 : vector<1x1xf32> to vector<4x1xf32>
    %18 = arith.subf %14, %17 : vector<4x1xf32>
    %19 = math.exp %18 : vector<4x1xf32>
    %cst_8 = arith.constant dense<0.000000e+00> : vector<1xf32>
    %20 = vector.multi_reduction <add>, %19, %cst_8 [0] : vector<4x1xf32> to vector<1xf32>
    %21 = vector.shape_cast %20 : vector<1xf32> to vector<1x1xf32>
    %22 = tpu.reciprocal %21 : vector<1x1xf32> -> vector<1x1xf32>
    %23 = vector.broadcast %22 : vector<1x1xf32> to vector<4x1xf32>
    %24 = arith.mulf %19, %23 : vector<4x1xf32>
    %c0_9 = arith.constant 0 : index
    %c0_10 = arith.constant 0 : index
    %25 = vector.load %arg4[%c0_9, %c0_10] : memref<4x1xf32, #tpu.memory_space<vmem>>, vector<4x1xf32>
    tpu.vector_store %arg4[%c0_9, %c0_10], %24 {strides = array<i32>} : memref<4x1xf32, #tpu.memory_space<vmem>>, vector<4x1xf32>,
    return
  }
  func.func @transform_0(%arg0: i32, %arg1: memref<1xi32, #tpu.memory_space<smem>>) -> (i32, i32, i32) {
    %c0 = arith.constant 0 : index
    %0 = memref.load %arg1[%c0] : memref<1xi32, #tpu.memory_space<smem>>
    %c0_i32 = arith.constant 0 : i32
    %c0_i32_0 = arith.constant 0 : i32
    %c0_i32_1 = arith.constant 0 : i32
    return %0, %c0_i32, %c0_i32_0 : i32, i32, i32
  }
  func.func @transform_1(%arg0: i32, %arg1: memref<1xi32, #tpu.memory_space<smem>>) -> (i32, i32) {
    %c0_i32 = arith.constant 0 : i32
    %c0_i32_0 = arith.constant 0 : i32
    %c0_i32_1 = arith.constant 0 : i32
    return %c0_i32, %c0_i32_0 : i32, i32
  }
  func.func @transform_2(%arg0: i32, %arg1: memref<1xi32, #tpu.memory_space<smem>>) -> (i32, i32) {
    %c0_i32 = arith.constant 0 : i32
    %c0_i32_0 = arith.constant 0 : i32
    %c0_i32_1 = arith.constant 0 : i32
    return %c0_i32, %c0_i32_0 : i32, i32
  }
}

</mosaic_0001>

<llo_original>
// kernel: tpu_custom_call.1
$region0: #{tpu_custom_call.1}
  #allocation0 [shape = 'u32[]', space=smem, size = 0x4, offset = 0x4, fixed_abs, tag = 'smem constant byte address 0x4 - core index']
  #allocation1 [shape = 'u32[144,128]{1,0:T(1,128)}', space=vmem, size = 0x12000, scoped, tag = 'internal scratch']
  #allocation2 [shape = 's32[1]{0}', space=sflag, size = 0x4, scoped, tag = 'scoped memory for tpu_custom_call.1']
  #allocation3 [shape = 's32[1]{0:T(128)S(6)}', space=smem, size = 0x200, scoped, tag = 'prefetched SMEM operand 0']
  %s0 = inlined_call_operand.<no memory space> [shape: s32[1], index: 0, kind: input, shape index: {}]
  %s1 = inlined_call_operand.hbm [shape: f32[4,1,32], index: 1, kind: input, shape index: {}]
  %s2 = inlined_call_operand.vmem [shape: f32[4,32], index: 2, kind: input, shape index: {}]
  %s3 = inlined_call_operand.vmem [shape: f32[4,1], index: 3, kind: output, shape index: {}]
  %s4 = sld [smem:[#allocation0]]
  $region22: #{tpu_custom_call.1} parent=0
    _
  %s6 = ssub.s32 1, %s4
  %s7 = scalar_select 0, %s6, %s4
  %8 = sst [smem:[#allocation3]] %s0
  $region1: #{tpu_custom_call.1} parent=0
    #allocation4 [shape = 'u8[512]{0}', space=vmem, size = 0x400, scoped, tag = 'input window, operand 1, single buffered']
    #allocation5 [shape = 's32[1]{0}', space=sflag, size = 0x4, scoped, tag = 'scoped memory for tpu_custom_call.1']
    %9 = vsyncpa [#allocation5], 0
    // Predicated region
    $region2: #{tpu_custom_call.1} parent=1 // pred_check
      _
    $region3: #{tpu_custom_call.1} parent=1 // pred_check_branch
      %11 = sbr.rel (0) target = $region5
    $region4: #{tpu_custom_call.1} parent=1 // pred_region
      %s12 = sld [smem:[#allocation3]]
      %s14 = ssub.s32 16, 16
      %15 = vsyncadd [#allocation5], %s14
      %s16 = smul.addr %s12, 16
      %s17 = scalar_lea.hbm %s1, %s16
      %s19 = sshll.u32 [#allocation4], 4
      %s20 = int_to_ptr.vmem [resolvable:$true] %s19
      %22 = dma.hbm_to_vmem [thread:$0]  %s17, 16, %s20, [#allocation5]
    $region5: #{tpu_custom_call.1} parent=1 // pred_fallthru
      _
    // Predicated region
    $region6: #{tpu_custom_call.1} parent=1 // pred_check
      _
    $region7: #{tpu_custom_call.1} parent=1 // pred_check_branch
      %24 = sbr.rel (0) target = $region9
    $region8: #{tpu_custom_call.1} parent=1 // pred_region
      _
    $region9: #{tpu_custom_call.1} parent=1 // pred_fallthru
      _
    // Predicated region
    $region10: #{tpu_custom_call.1} parent=1 // pred_check
      _
    $region11: #{tpu_custom_call.1} parent=1 // pred_check_branch
      %26 = sbr.rel (0) target = $region13
    $region12: #{tpu_custom_call.1} parent=1 // pred_region
      %27 = dma.done [#allocation5], 16
    $region13: #{tpu_custom_call.1} parent=1 // pred_fallthru
      _
    %s28 = sld [smem:[#allocation3]]
    %s29 = sld [smem:[#allocation3]]
    %v30 = vld [vmem:[#allocation4] sm:$0x1]
    %v31 = vld [vmem:[%s2] sm:$0xf]
    %v33 = vlaneseq
    %v34 = vshrl.u32 %v33, 7
    %v35 = vsub.s32 0, %v34
    %v36 = vrot.slane %v30, %v35
    %v38 = vmul.f32 %v31, %v36
    %vm39 = vcmask 257024
    %v40 = vsel %vm39, %v38, 0.0
    %41 = vadd.xlane.f32.xlu0 %v40
    %v42 = vpop.xlane.xlu0 %41
    %v43 = vmul.f32 %v42, 0.058925565
    %v44 = vlaneseq
    %v45 = vshrl.u32 %v44, 7
    %v46 = vstv %s29
    %vm47 = vcmp.eq.s32.totalorder %v45, %v46
    %v48 = vsel %vm47, -inf, %v43
    %vm49 = vcmask 1043456
    %v50 = vsel %vm49, %v48, -inf
    %v51 = vrot.slane %v50, 4
    %v52 = vmax.f32 %v50, %v51
    %v53 = vrot.slane %v52, 2
    %v54 = vmax.f32 %v52, %v53
    %v55 = vrot.slane %v54, 1
    %v56 = vmax.f32 %v54, %v55
    %v57 = vsub.f32 %v48, %v56
    %v58 = vmul.f32 %v57, 1.442695
    %v59 = vpow.pop %v58
    %v60 = vsel %vm49, %v59, 0.0
    %v61 = vrot.slane %v60, 4
    %v62 = vadd.f32 %v60, %v61
    %v63 = vrot.slane %v62, 2
    %v64 = vadd.f32 %v62, %v63
    %v65 = vrot.slane %v64, 1
    %v66 = vadd.f32 %v64, %v65
    %v67 = vrcp.pop %v66
    %v68 = vmul.f32 %v59, %v67
    %vm69 = vcmask 3072
    %70 = vst.msk [vmem:[%s3] sm:$0xf] %vm69, %v68
    // Predicated region
    $region14: #{tpu_custom_call.1} parent=1 // pred_check
      _
    $region15: #{tpu_custom_call.1} parent=1 // pred_check_branch
      %72 = sbr.rel (0) target = $region17
    $region16: #{tpu_custom_call.1} parent=1 // pred_region
      _
    $region17: #{tpu_custom_call.1} parent=1 // pred_fallthru
      _
    // Predicated region
    $region18: #{tpu_custom_call.1} parent=1 // pred_check
      _
    $region19: #{tpu_custom_call.1} parent=1 // pred_check_branch
      %74 = sbr.rel (0) target = $region21
    $region20: #{tpu_custom_call.1} parent=1 // pred_region
      _
    $region21: #{tpu_custom_call.1} parent=1 // pred_fallthru
      _
    %75 = vsyncpa [#allocation5], 1

</llo_original>
